<compile_context>
chip_gen: v7x
topology: tpu7x:2x2x1
jax: 0.10.0
libtpu: 0.0.40
codegen_flags: <defaults>
</compile_context>

<pallas_src>
import functools
import math

import jax
import jax.numpy as jnp
import numpy as np
from jax.experimental import pallas as pl
from jax.experimental.pallas import tpu as pltpu


# ----------------------------------------------------------------------------
# Frequency tables (plain JAX glue; deterministic, no checkpoints).
# ----------------------------------------------------------------------------
def precompute_freqs(d_model: int, max_length: int, base: int = 10000):
    """sin/cos tables, each (max_length, d_model // 2), float32."""
    freqs = jnp.arange(0, d_model, 2, dtype=jnp.float32) / d_model
    inv_freq = jnp.asarray(base, jnp.float32) ** (-freqs)          # (D/2,)
    seq_idx = jnp.arange(max_length, dtype=jnp.float32)            # (L,)
    sinusoid = jnp.outer(seq_idx, inv_freq)                        # (L, D/2)
    return jnp.sin(sinusoid), jnp.cos(sinusoid)


# ----------------------------------------------------------------------------
# Hardware queries / tiny one-time probes.
# ----------------------------------------------------------------------------
@functools.lru_cache(maxsize=None)
def _vmem_capacity_bytes() -> int:
    try:
        cap = int(getattr(pltpu.get_tpu_info(), "vmem_capacity_bytes", 0))
        if cap > 0:
            return cap
    except Exception:
        pass
    return 64 << 20  # conservative fallback: v7x per-TensorCore VMEM


@functools.lru_cache(maxsize=None)
def _roll_is_numpy_convention() -> bool:
    """True if pltpu.roll(x, s, -1)[j] == x[(j - s) % n] (i.e. jnp.roll)."""
    def kernel(x_ref, o_ref):
        o_ref[...] = pltpu.roll(x_ref[...], shift=1, axis=1)

    try:
        x = jnp.tile(jnp.arange(128, dtype=jnp.float32)[None, :], (8, 1))
        y = pl.pallas_call(
            kernel, out_shape=jax.ShapeDtypeStruct((8, 128), jnp.float32))(x)
        return float(np.asarray(y)[0, 0]) == 127.0
    except Exception:
        return True  # assume jnp.roll semantics


def _shift_gather_plus(k: int, n: int) -> int:
    """Shift s such that pltpu.roll(x, s, axis=-1)[..., j] == x[..., (j+k) % n]."""
    return (n - k) % n if _roll_is_numpy_convention() else k % n


# ----------------------------------------------------------------------------
# Kernels
# ----------------------------------------------------------------------------
def _make_rope_kernel_unpacked(half: int):
    """Block last dim == one head's D: single XLU roll + pre-signed sin table."""
    def kernel(cos_ref, sin_ref, q_ref, k_ref, qo_ref, ko_ref):
        cos = cos_ref[...][None]                       # (1, ts, D) bcast over tbh
        sin = sin_ref[...][None]                       # pre-signed: [-sin, sin]

        def rope(x):
            # rotate_half(x) * [sin, sin] == roll(x, D/2) * [-sin, sin]
            return x * cos + pltpu.roll(x, shift=half, axis=x.ndim - 1) * sin

        qo_ref[...] = rope(q_ref[...]).astype(qo_ref.dtype)
        ko_ref[...] = rope(k_ref[...]).astype(ko_ref.dtype)

    return kernel


def _make_rope_kernel_packed(shift_plus: int, shift_minus: int):
    """Lane-packed (g heads' worth of positions per 128-lane row).

    Segmented rotate_half:
      out = x*cos + roll->x[j+D/2] * [-sin, 0] + roll->x[j-D/2] * [0, sin]
    Each roll only needs lanes that stay inside their own D-segment, so a full
    128-lane roll is safe; the pre-masked sin tables zero out the other lanes.
    """
    def kernel(cos_ref, sin_a_ref, sin_b_ref, q_ref, k_ref, qo_ref, ko_ref):
        cos = cos_ref[...][None]
        sin_a = sin_a_ref[...][None]                   # [-sin, 0] per segment
        sin_b = sin_b_ref[...][None]                   # [0, +sin] per segment

        def rope(x):
            ax = x.ndim - 1
            return (x * cos
                    + pltpu.roll(x, shift=shift_plus, axis=ax) * sin_a
                    + pltpu.roll(x, shift=shift_minus, axis=ax) * sin_b)

        qo_ref[...] = rope(q_ref[...]).astype(qo_ref.dtype)
        ko_ref[...] = rope(k_ref[...]).astype(ko_ref.dtype)

    return kernel


# ----------------------------------------------------------------------------
# Tiling heuristics
# ----------------------------------------------------------------------------
def _choose_tiles(bh: int, sp: int, row_bytes: int, target_bytes: int,
                  want_steps: int = 4):
    """Pick (tbh, ts): each block covers tbh slabs x ts (packed) seq rows.

    Aims for ~target_bytes per input block, keeps ts a multiple of 8 (or the
    full seq extent), and guarantees >= want_steps grid steps (>= 2 per v7x
    TensorCore) whenever the problem is splittable.  No divisibility is
    required — the grid uses cdiv and the last block may be partial.
    """
    row_bytes = max(1, row_bytes)
    ts_cap = max(1, target_bytes // row_bytes)
    ts = sp if sp <= ts_cap else max(8, (ts_cap // 8) * 8)
    tbh = int(max(1, min(bh, target_bytes // max(1, ts * row_bytes))))

    def n_steps(a, b):
        return (-(-bh // a)) * (-(-sp // b))

    while n_steps(tbh, ts) < want_steps:
        if tbh > 1:
            tbh = max(1, tbh // 2)
        elif ts > 8:
            new_ts = max(8, ((ts // 2) + 7) // 8 * 8)
            if new_ts >= ts:
                break
            ts = new_ts
        else:
            break
    return int(tbh), int(ts)


# ----------------------------------------------------------------------------
# Module
# ----------------------------------------------------------------------------
class RotaryPositionEmbedding:
    def __init__(self, d_model: int, max_length: int = 5000, base: int = 10000):
        assert d_model % 2 == 0, "d_model must be even for RoPE."
        self.d_model = d_model
        self.max_length = max_length
        sin, cos = precompute_freqs(d_model, max_length, base)    # (L, D/2) f32
        self.sin = sin
        self.cos = cos
        zeros = jnp.zeros_like(sin)
        # Hoisted once at init: duplication, rotate_half sign, lane masks.
        self.cos_full = jnp.concatenate([cos, cos], axis=-1)      # (L, D)
        self.sin_signed = jnp.concatenate([-sin, sin], axis=-1)   # single-roll path
        self.sin_first = jnp.concatenate([-sin, zeros], axis=-1)  # pairs w/ x[j+D/2]
        self.sin_second = jnp.concatenate([zeros, sin], axis=-1)  # pairs w/ x[j-D/2]

    # forward(): identity pass-through (per the PyTorch module) — no kernel.
    def __call__(self, x):
        return x

    forward = __call__

    def apply_rotary_pos_emb(self, q, k, position_ids=None, donate_qk: bool = False):
        assert position_ids is None, "only position_ids=None (arange) supported"
        assert q.shape == k.shape, "q and k must have the same shape"
        assert q.dtype == k.dtype, "q and k must have the same dtype"
        *lead, S, D = q.shape
        assert D == self.d_model and S <= self.max_length

        dtype = q.dtype
        itemsize = jnp.dtype(dtype).itemsize
        bh = int(math.prod(lead)) if lead else 1

        qf = q.reshape(bh, S, D)
        kf = k.reshape(bh, S, D)

        # --- lane packing for head_dim < 128 (free reshape) -----------------
        g = 128 // D if (D < 128 and 128 % D == 0) else 1
        if g > 1 and S % g != 0:
            g = 1
        packed = g > 1
        sp, L = S // g, g * D
        qf = qf.reshape(bh, sp, L)
        kf = kf.reshape(bh, sp, L)

        cos_t = self.cos_full[:S].astype(dtype)
        if packed:
            half = D // 2
            shift_plus = _shift_gather_plus(half, L)      # roll -> x[j + D/2]
            shift_minus = (L - shift_plus) % L            # roll -> x[j - D/2]
            kernel = _make_rope_kernel_packed(shift_plus, shift_minus)
            tables = (cos_t.reshape(sp, L),
                      self.sin_first[:S].astype(dtype).reshape(sp, L),
                      self.sin_second[:S].astype(dtype).reshape(sp, L))
        else:
            kernel = _make_rope_kernel_unpacked(D // 2)
            tables = (cos_t, self.sin_signed[:S].astype(dtype))

        # --- tiling & VMEM budget (generation-aware) ------------------------
        cap = _vmem_capacity_bytes()
        target = (2 << 20) if cap <= (64 << 20) else (6 << 20)
        tbh, ts = _choose_tiles(bh, sp, L * itemsize, target)
        n_s, n_bh = pl.cdiv(sp, ts), pl.cdiv(bh, tbh)
        grid = (n_s, n_bh)      # seq outer so tables are only re-fetched per s-block

        qk_spec = pl.BlockSpec((tbh, ts, L), lambda j, i: (i, j, 0))
        tbl_spec = pl.BlockSpec((ts, L), lambda j, i: (j, 0))

        block_bytes = tbh * ts * L * itemsize
        table_block_bytes = ts * L * itemsize
        required = (8 * block_bytes                       # q, k, qo, ko double-buffered
                    + 2 * len(tables) * table_block_bytes
                    + (4 << 20))                          # headroom for internal scratch
        vmem_limit = int(min(max(required, 32 << 20), (cap * 85) // 100))

        kwargs = {}
        if donate_qk:
            # q -> q_out, k -> k_out (only safe if un-rotated q/k are dead).
            kwargs["input_output_aliases"] = {len(tables): 0, len(tables) + 1: 1}

        q_out, k_out = pl.pallas_call(
            kernel,
            out_shape=(jax.ShapeDtypeStruct((bh, sp, L), dtype),
                       jax.ShapeDtypeStruct((bh, sp, L), dtype)),
            grid=grid,
            in_specs=[tbl_spec] * len(tables) + [qk_spec, qk_spec],
            out_specs=(qk_spec, qk_spec),
            compiler_params=pltpu.CompilerParams(
                dimension_semantics=("parallel", "parallel"),
                vmem_limit_bytes=vmem_limit),
            **kwargs,
        )(*tables, qf, kf)

        q_out = q_out.reshape(*lead, S, D) if lead else q_out.reshape(S, D)
        k_out = k_out.reshape(*lead, S, D) if lead else k_out.reshape(S, D)
        return q_out, k_out


# ----------------------------------------------------------------------------
# Pure-JAX reference (original, non-presigned formulation) for verification.
# ----------------------------------------------------------------------------
def _rope_ref(q, k, sin_table, cos_table):
    S, D = q.shape[-2], q.shape[-1]
    sin = jnp.concatenate([sin_table[:S], sin_table[:S]], axis=-1)  # (S, D)
    cos = jnp.concatenate([cos_table[:S], cos_table[:S]], axis=-1)

    def rot(x):
        x1, x2 = x[..., : D // 2], x[..., D // 2:]
        return jnp.concatenate([-x2, x1], axis=-1)

    qf, kf = q.astype(jnp.float32), k.astype(jnp.float32)
    qe = qf * cos + rot(qf) * sin
    ke = kf * cos + rot(kf) * sin
    return qe.astype(q.dtype), ke.astype(k.dtype)


# ----------------------------------------------------------------------------
if __name__ == "__main__":
    key = jax.random.PRNGKey(0)

    # --- Test 1: lane-packed path (head_dim 32 -> 4 positions per 128 lanes).
    d_model, max_length = 32, 64
    B, H, S = 2, 2, 8
    rope = RotaryPositionEmbedding(d_model, max_length)

    kq, kk, kx, key = jax.random.split(key, 4)
    q = jax.random.normal(kq, (B, H, S, d_model), dtype=jnp.float32)
    k = jax.random.normal(kk, (B, H, S, d_model), dtype=jnp.float32)
    x = jax.random.normal(kx, (B, S, d_model), dtype=jnp.float32)

    y = rope(x)                           # forward(): identity, no kernel
    jax.block_until_ready(y)
    np.testing.assert_array_equal(np.asarray(y), np.asarray(x))

    q_emb, k_emb = rope.apply_rotary_pos_emb(q, k)
    jax.block_until_ready((q_emb, k_emb))
    q_ref, k_ref = _rope_ref(q, k, rope.sin, rope.cos)
    np.testing.assert_allclose(np.asarray(q_emb), np.asarray(q_ref), rtol=1e-5, atol=1e-5)
    np.testing.assert_allclose(np.asarray(k_emb), np.asarray(k_ref), rtol=1e-5, atol=1e-5)

    # --- Test 2: unpacked path + non-dividing grid (awkward B*H and seq).
    d_model2, max_length2 = 256, 64
    B2, H2, S2 = 1, 3, 10
    rope2 = RotaryPositionEmbedding(d_model2, max_length2)

    kq2, kk2 = jax.random.split(key)
    q2 = jax.random.normal(kq2, (B2, H2, S2, d_model2), dtype=jnp.float32)
    k2 = jax.random.normal(kk2, (B2, H2, S2, d_model2), dtype=jnp.float32)

    q2e, k2e = rope2.apply_rotary_pos_emb(q2, k2)
    jax.block_until_ready((q2e, k2e))
    q2r, k2r = _rope_ref(q2, k2, rope2.sin, rope2.cos)
    np.testing.assert_allclose(np.asarray(q2e), np.asarray(q2r), rtol=1e-5, atol=1e-5)
    np.testing.assert_allclose(np.asarray(k2e), np.asarray(k2r), rtol=1e-5, atol=1e-5)

    print("KERNEL_OK")
</pallas_src>

<mosaic_0001>
module attributes {stable_mosaic.version = 11 : i64} {
  func.func @kernel(%arg0: memref<8x128xf32, #tpu.memory_space<vmem>>, %arg1: memref<8x128xf32, #tpu.memory_space<vmem>>) attributes {dimension_semantics = [], scalar_prefetch = 0 : i64, scratch_operands = 0 : i64, tpu.core_type = #tpu.core_type<tc>} {
    %c0 = arith.constant 0 : index
    %c0_0 = arith.constant 0 : index
    %0 = vector.load %arg0[%c0, %c0_0] : memref<8x128xf32, #tpu.memory_space<vmem>>, vector<8x128xf32>
    %c1_i32 = arith.constant 1 : i32
    %1 = tpu.dynamic_rotate %0 by %c1_i32 dim 1 : vector<8x128xf32>, i32 -> vector<8x128xf32>
    %c0_1 = arith.constant 0 : index
    %c0_2 = arith.constant 0 : index
    %2 = vector.load %arg1[%c0_1, %c0_2] : memref<8x128xf32, #tpu.memory_space<vmem>>, vector<8x128xf32>
    tpu.vector_store %arg1[%c0_1, %c0_2], %1 {strides = array<i32>} : memref<8x128xf32, #tpu.memory_space<vmem>>, vector<8x128xf32>,
    return
  }
}

module attributes {stable_mosaic.version = 11 : i64} {
  func.func @kernel(%arg0: i32, %arg1: i32, %arg2: memref<2x128xf32, #tpu.memory_space<vmem>>, %arg3: memref<2x128xf32, #tpu.memory_space<vmem>>, %arg4: memref<2x128xf32, #tpu.memory_space<vmem>>, %arg5: memref<1x2x128xf32, #tpu.memory_space<vmem>>, %arg6: memref<1x2x128xf32, #tpu.memory_space<vmem>>, %arg7: memref<1x2x128xf32, #tpu.memory_space<vmem>>, %arg8: memref<1x2x128xf32, #tpu.memory_space<vmem>>) attributes {dimension_semantics = [#tpu.dimension_semantics<parallel>, #tpu.dimension_semantics<parallel>], iteration_bounds = array<i64: 1, 4>, scalar_prefetch = 0 : i64, scratch_operands = 0 : i64, tpu.core_type = #tpu.core_type<tc>, window_params = [{transform_indices = @transform_0, window_bounds = array<i64: 2, 128>}, {transform_indices = @transform_1, window_bounds = array<i64: 2, 128>}, {transform_indices = @transform_2, window_bounds = array<i64: 2, 128>}, {transform_indices = @transform_3, window_bounds = array<i64: 1, 2, 128>}, {transform_indices = @transform_4, window_bounds = array<i64: 1, 2, 128>}, {transform_indices = @transform_5, window_bounds = array<i64: 1, 2, 128>}, {transform_indices = @transform_6, window_bounds = array<i64: 1, 2, 128>}]} {
    %c0 = arith.constant 0 : index
    %c0_0 = arith.constant 0 : index
    %0 = vector.load %arg2[%c0, %c0_0] : memref<2x128xf32, #tpu.memory_space<vmem>>, vector<2x128xf32>
    %1 = vector.shape_cast %0 : vector<2x128xf32> to vector<1x2x128xf32>
    %c0_1 = arith.constant 0 : index
    %c0_2 = arith.constant 0 : index
    %2 = vector.load %arg3[%c0_1, %c0_2] : memref<2x128xf32, #tpu.memory_space<vmem>>, vector<2x128xf32>
    %3 = vector.shape_cast %2 : vector<2x128xf32> to vector<1x2x128xf32>
    %c0_3 = arith.constant 0 : index
    %c0_4 = arith.constant 0 : index
    %4 = vector.load %arg4[%c0_3, %c0_4] : memref<2x128xf32, #tpu.memory_space<vmem>>, vector<2x128xf32>
    %5 = vector.shape_cast %4 : vector<2x128xf32> to vector<1x2x128xf32>
    %c0_5 = arith.constant 0 : index
    %c0_6 = arith.constant 0 : index
    %c0_7 = arith.constant 0 : index
    %6 = vector.load %arg5[%c0_5, %c0_6, %c0_7] : memref<1x2x128xf32, #tpu.memory_space<vmem>>, vector<1x2x128xf32>
    %7 = arith.mulf %6, %1 : vector<1x2x128xf32>
    %c112_i32 = arith.constant 112 : i32
    %8 = tpu.dynamic_rotate %6 by %c112_i32 dim 2 : vector<1x2x128xf32>, i32 -> vector<1x2x128xf32>
    %9 = arith.mulf %8, %3 : vector<1x2x128xf32>
    %10 = arith.addf %7, %9 : vector<1x2x128xf32>
    %c16_i32 = arith.constant 16 : i32
    %11 = tpu.dynamic_rotate %6 by %c16_i32 dim 2 : vector<1x2x128xf32>, i32 -> vector<1x2x128xf32>
    %12 = arith.mulf %11, %5 : vector<1x2x128xf32>
    %13 = arith.addf %10, %12 : vector<1x2x128xf32>
    %c0_8 = arith.constant 0 : index
    %c0_9 = arith.constant 0 : index
    %c0_10 = arith.constant 0 : index
    %14 = vector.load %arg7[%c0_8, %c0_9, %c0_10] : memref<1x2x128xf32, #tpu.memory_space<vmem>>, vector<1x2x128xf32>
    tpu.vector_store %arg7[%c0_8, %c0_9, %c0_10], %13 {strides = array<i32>} : memref<1x2x128xf32, #tpu.memory_space<vmem>>, vector<1x2x128xf32>,
    %c0_11 = arith.constant 0 : index
    %c0_12 = arith.constant 0 : index
    %c0_13 = arith.constant 0 : index
    %15 = vector.load %arg6[%c0_11, %c0_12, %c0_13] : memref<1x2x128xf32, #tpu.memory_space<vmem>>, vector<1x2x128xf32>
    %16 = arith.mulf %15, %1 : vector<1x2x128xf32>
    %c112_i32_14 = arith.constant 112 : i32
    %17 = tpu.dynamic_rotate %15 by %c112_i32_14 dim 2 : vector<1x2x128xf32>, i32 -> vector<1x2x128xf32>
    %18 = arith.mulf %17, %3 : vector<1x2x128xf32>
    %19 = arith.addf %16, %18 : vector<1x2x128xf32>
    %c16_i32_15 = arith.constant 16 : i32
    %20 = tpu.dynamic_rotate %15 by %c16_i32_15 dim 2 : vector<1x2x128xf32>, i32 -> vector<1x2x128xf32>
    %21 = arith.mulf %20, %5 : vector<1x2x128xf32>
    %22 = arith.addf %19, %21 : vector<1x2x128xf32>
    %c0_16 = arith.constant 0 : index
    %c0_17 = arith.constant 0 : index
    %c0_18 = arith.constant 0 : index
    %23 = vector.load %arg8[%c0_16, %c0_17, %c0_18] : memref<1x2x128xf32, #tpu.memory_space<vmem>>, vector<1x2x128xf32>
    tpu.vector_store %arg8[%c0_16, %c0_17, %c0_18], %22 {strides = array<i32>} : memref<1x2x128xf32, #tpu.memory_space<vmem>>, vector<1x2x128xf32>,
    return
  }
  func.func @transform_0(%arg0: i32, %arg1: i32) -> (i32, i32) {
    %c0_i32 = arith.constant 0 : i32
    %c0_i32_0 = arith.constant 0 : i32
    return %arg0, %c0_i32 : i32, i32
  }
  func.func @transform_1(%arg0: i32, %arg1: i32) -> (i32, i32) {
    %c0_i32 = arith.constant 0 : i32
    %c0_i32_0 = arith.constant 0 : i32
    return %arg0, %c0_i32 : i32, i32
  }
  func.func @transform_2(%arg0: i32, %arg1: i32) -> (i32, i32) {
    %c0_i32 = arith.constant 0 : i32
    %c0_i32_0 = arith.constant 0 : i32
    return %arg0, %c0_i32 : i32, i32
  }
  func.func @transform_3(%arg0: i32, %arg1: i32) -> (i32, i32, i32) {
    %c0_i32 = arith.constant 0 : i32
    %c0_i32_0 = arith.constant 0 : i32
    return %arg1, %arg0, %c0_i32 : i32, i32, i32
  }
  func.func @transform_4(%arg0: i32, %arg1: i32) -> (i32, i32, i32) {
    %c0_i32 = arith.constant 0 : i32
    %c0_i32_0 = arith.constant 0 : i32
    return %arg1, %arg0, %c0_i32 : i32, i32, i32
  }
  func.func @transform_5(%arg0: i32, %arg1: i32) -> (i32, i32, i32) {
    %c0_i32 = arith.constant 0 : i32
    %c0_i32_0 = arith.constant 0 : i32
    return %arg1, %arg0, %c0_i32 : i32, i32, i32
  }
  func.func @transform_6(%arg0: i32, %arg1: i32) -> (i32, i32, i32) {
    %c0_i32 = arith.constant 0 : i32
    %c0_i32_0 = arith.constant 0 : i32
    return %arg1, %arg0, %c0_i32 : i32, i32, i32
  }
}

</mosaic_0001>

<llo_original>
// kernel: tpu_custom_call.1
$region0: #{tpu_custom_call.1}
  #allocation0 [shape = 'u32[]', space=smem, size = 0x4, offset = 0x4, fixed_abs, tag = 'smem constant byte address 0x4 - core index']
  #allocation1 [shape = 'u32[144,128]{1,0:T(1,128)}', space=vmem, size = 0x12000, scoped, tag = 'internal scratch']
  %s0 = inlined_call_operand.hbm [shape: f32[8,128], index: 0, kind: input, shape index: {}]
  %s1 = inlined_call_operand.hbm [shape: f32[8,128], index: 1, kind: output, shape index: {}]
  %s2 = sld [smem:[#allocation0]]
  $region18: #{tpu_custom_call.1} parent=0
    _
  %s4 = ssub.s32 1, %s2
  %s5 = scalar_select 0, %s4, %s2
  $region1: #{tpu_custom_call.1} parent=0
    #allocation2 [shape = 'u8[4096]{0}', space=vmem, size = 0x1000, scoped, tag = 'input window, operand 0, single buffered']
    #allocation3 [shape = 's32[1]{0}', space=sflag, size = 0x4, scoped, tag = 'scoped memory for tpu_custom_call.1']
    #allocation4 [shape = 's32[1]{0}', space=sflag, size = 0x4, scoped, tag = 'scoped memory for tpu_custom_call.1']
    #allocation5 [shape = 'u8[4096]{0}', space=vmem, size = 0x1000, scoped, tag = 'output window, operand 0, single buffered']
    %6 = vsyncpa [#allocation3], 0
    %7 = vsyncpa [#allocation4], 0
    // Predicated region
    $region2: #{tpu_custom_call.1} parent=1 // pred_check
      _
    $region3: #{tpu_custom_call.1} parent=1 // pred_check_branch
      %9 = sbr.rel (0) target = $region5
    $region4: #{tpu_custom_call.1} parent=1 // pred_region
      %s11 = ssub.s32 128, 128
      %12 = vsyncadd [#allocation3], %s11
      %s14 = sshll.u32 [#allocation2], 4
      %s15 = int_to_ptr.vmem [resolvable:$true] %s14
      %17 = dma.hbm_to_vmem [thread:$0]  %s0, 128, %s15, [#allocation3]
    $region5: #{tpu_custom_call.1} parent=1 // pred_fallthru
      _
    // Predicated region
    $region6: #{tpu_custom_call.1} parent=1 // pred_check
      _
    $region7: #{tpu_custom_call.1} parent=1 // pred_check_branch
      %19 = sbr.rel (0) target = $region9
    $region8: #{tpu_custom_call.1} parent=1 // pred_region
      %20 = dma.done [#allocation3], 128
    $region9: #{tpu_custom_call.1} parent=1 // pred_fallthru
      _
    %v21 = vld [vmem:[#allocation2] sm:$0xff]
    %22 = vrot.lane.b32.xlu0 %v21, 1
    %v23 = vpop.permute.xlu0 %22
    %24 = vst [vmem:[#allocation5] sm:$0xff] %v23
    // Predicated region
    $region10: #{tpu_custom_call.1} parent=1 // pred_check
      _
    $region11: #{tpu_custom_call.1} parent=1 // pred_check_branch
      %26 = sbr.rel (0) target = $region13
    $region12: #{tpu_custom_call.1} parent=1 // pred_region
      %s28 = ssub.s32 128, 128
      %29 = vsyncadd [#allocation4], %s28
      %s31 = sshll.u32 [#allocation5], 4
      %s32 = int_to_ptr.vmem [resolvable:$true] %s31
      %34 = dma.vmem_to_hbm [thread:$0]  %s32, 128, %s1, [#allocation4]
    $region13: #{tpu_custom_call.1} parent=1 // pred_fallthru
      _
    // Predicated region
    $region14: #{tpu_custom_call.1} parent=1 // pred_check
      _
    $region15: #{tpu_custom_call.1} parent=1 // pred_check_branch
      %36 = sbr.rel (0) target = $region17
    $region16: #{tpu_custom_call.1} parent=1 // pred_region
      %37 = dma.done [#allocation4], 128
    $region17: #{tpu_custom_call.1} parent=1 // pred_fallthru
      _
    %38 = vsyncpa [#allocation3], 1
    %39 = vsyncpa [#allocation4], 1

// kernel: tpu_custom_call.1
$region0: #{tpu_custom_call.1}
  #allocation0 [shape = 'u32[]', space=smem, size = 0x4, offset = 0x4, fixed_abs, tag = 'smem constant byte address 0x4 - core index']
  #allocation1 [shape = 'u32[144,128]{1,0:T(1,128)}', space=vmem, size = 0x12000, scoped, tag = 'internal scratch']
  %s0 = inlined_call_operand.hbm [shape: f32[2,128], index: 0, kind: input, shape index: {}]
  %s1 = inlined_call_operand.vmem [shape: f32[2,128], index: 1, kind: input, shape index: {}]
  %s2 = inlined_call_operand.hbm [shape: f32[2,128], index: 2, kind: input, shape index: {}]
  %s3 = inlined_call_operand.vmem [shape: f32[4,2,128], index: 3, kind: input, shape index: {}]
  %s4 = inlined_call_operand.hbm [shape: f32[4,2,128], index: 4, kind: input, shape index: {}]
  %s5 = inlined_call_operand.hbm [shape: f32[4,2,128], index: 5, kind: output, shape index: {0}]
  %s6 = inlined_call_operand.hbm [shape: f32[4,2,128], index: 6, kind: output, shape index: {1}]
  %7 = xla_tuple %s5, %s6
  %s8 = sld [smem:[#allocation0]]
  $region73: #{tpu_custom_call.1} parent=0
    _
  %s10 = ssub.s32 1, %s8
  %s11 = scalar_select 0, %s10, %s8
  $region1: #{tpu_custom_call.1} parent=0
    #allocation2 [shape = 'u8[1024]{0}', space=vmem, size = 0x400, scoped, tag = 'input window, operand 0, single buffered']
    #allocation3 [shape = 's32[2]{0}', space=sflag, size = 0x8, scoped, tag = 'scoped memory for tpu_custom_call.1']
    #allocation4 [shape = 's32[2]{0}', space=sflag, size = 0x8, scoped, tag = 'scoped memory for tpu_custom_call.1']
    #allocation5 [shape = 'u8[1024]{0}', space=vmem, size = 0x400, scoped, tag = 'input window, operand 2, single buffered']
    #allocation6 [shape = 's32[1]{0}', space=sflag, size = 0x4, scoped, tag = 'scoped memory for tpu_custom_call.1']
    #allocation7 [shape = 'u8[2048]{0}', space=vmem, size = 0x800, scoped, tag = 'input window, operand 4']
    #allocation8 [shape = 'u8[2048]{0}', space=vmem, size = 0x800, scoped, tag = 'output window, operand 0']
    #allocation9 [shape = 'u8[2048]{0}', space=vmem, size = 0x800, scoped, tag = 'output window, operand 1']
    #allocation10 [shape = 's32[2]{0}', space=sflag, size = 0x8, scoped, tag = 'scoped memory for tpu_custom_call.1']
    %12 = vsyncpa [#allocation3], 0
    %13 = vsyncpa [#allocation6], 0
    %14 = vsyncpa [#allocation4], 0
    %s15 = scalar_lea.sflag [#allocation4], 1
    %16 = vsyncpa %s15, 0
    %17 = vsyncpa [#allocation10], 0
    %s18 = scalar_lea.sflag [#allocation10], 1
    %19 = vsyncpa %s18, 0
    loop: start=0, step=1, limit=6
    $region2: #{tpu_custom_call.1} parent=1 // loop_pre_header
      _
    $region3: #{tpu_custom_call.1} parent=1 // loop_header
      %s21 = sphi 0, %s25
      %p22 = scmp.ge.s32.totalorder %s21, 6
      %s28 = sphi 0, %s40
      %s29 = sphi 0, %s36
      %s30 = sphi 0, %s28
      %s31 = sphi 0, %s29
      %s32 = sphi 0, %s30
      %s33 = sphi 0, %s31
      %s43 = sphi 0, %s45
      %s46 = sphi 0, %s43
      %s47 = sphi 0, %s46
      %s63 = sphi 0, %s47
      %s69 = sphi 0, %s71
      %s72 = sphi 0, %s69
      %s73 = sphi 0, %s72
      %s89 = sphi 0, %s73
      %s95 = sphi 0, %s97
      %s98 = sphi 0, %s95
      %s99 = sphi 0, %s98
      %s115 = sphi 0, %s99
      %s123 = sphi 0, %s125
      %s126 = sphi 0, %s123
      %s127 = sphi 0, %s126
      %s143 = sphi 0, %s127
      %s151 = sphi 0, %s153
      %s154 = sphi 0, %s151
      %s155 = sphi 0, %s154
      %s171 = sphi 0, %s155
      %s179 = sphi 0, %s181
      %s182 = sphi 0, %s179
      %s183 = sphi 0, %s182
      %s199 = sphi 0, %s183
      %s207 = sphi 0, %s209
      %s210 = sphi 0, %s207
      %s211 = sphi 0, %s210
      %s227 = sphi 0, %s211
    $region4: #{tpu_custom_call.1} parent=1 // loop_header_branch
      %24 = sbr.rel (%p22) target = $region8
    $region5: #{tpu_custom_call.1} parent=1 // loop_body
      %s26 = ssub.s32 %s21, 1
      %s27 = ssub.s32 %s21, 2
      %s34 = sadd.s32 1, %s29
      %p35 = scmp.ge.s32.totalorder %s34, 4
      %s36 = scalar_select %p35, 0, %s34
      %s37 = sadd.s32 1, %s28
      %s38 = scalar_select %p35, %s37, %s28
      %p39 = scmp.ge.s32.totalorder %s38, 1
      %s40 = scalar_select %p39, 0, %s38
      %s41 = ssub.s32 %s28, %s40
      %p42 = scmp.eq.s32.totalorder %s41, 0
      %s44 = sadd.s32 %s43, 1
      %s45 = scalar_select %p42, %s43, %s44
      %p48 = pneg %p42
      %p49 = scmp.eq.s32.totalorder %s21, 3
      %p50 = por %p48, %p49
      %p51 = scmp.ne.s32.totalorder %s43, %s46
      %p52 = scmp.eq.s32.totalorder %s21, 0
      %p53 = por %p51, %p52
      %p54 = scmp.ne.s32.totalorder %s43, %s46
      %p55 = scmp.eq.s32.totalorder %s26, 3
      %p56 = por %p54, %p55
      %p57 = scmp.ne.s32.totalorder %s46, %s47
      %p58 = scmp.eq.s32.totalorder %s26, 0
      %p59 = por %p57, %p58
      %p60 = scmp.ne.s32.totalorder %s46, %s47
      %p61 = scmp.eq.s32.totalorder %s27, 3
      %p62 = por %p60, %p61
      %p64 = scmp.ne.s32.totalorder %s47, %s63
      %p65 = scmp.eq.s32.totalorder %s27, 0
      %p66 = por %p64, %p65
      %s67 = ssub.s32 %s28, %s40
      %p68 = scmp.eq.s32.totalorder %s67, 0
      %s70 = sadd.s32 %s69, 1
      %s71 = scalar_select %p68, %s69, %s70
      %p74 = pneg %p68
      %p75 = scmp.eq.s32.totalorder %s21, 3
      %p76 = por %p74, %p75
      %p77 = scmp.ne.s32.totalorder %s69, %s72
      %p78 = scmp.eq.s32.totalorder %s21, 0
      %p79 = por %p77, %p78
      %p80 = scmp.ne.s32.totalorder %s69, %s72
      %p81 = scmp.eq.s32.totalorder %s26, 3
      %p82 = por %p80, %p81
      %p83 = scmp.ne.s32.totalorder %s72, %s73
      %p84 = scmp.eq.s32.totalorder %s26, 0
      %p85 = por %p83, %p84
      %p86 = scmp.ne.s32.totalorder %s72, %s73
      %p87 = scmp.eq.s32.totalorder %s27, 3
      %p88 = por %p86, %p87
      %p90 = scmp.ne.s32.totalorder %s73, %s89
      %p91 = scmp.eq.s32.totalorder %s27, 0
      %p92 = por %p90, %p91
      %s93 = ssub.s32 %s28, %s40
      %p94 = scmp.eq.s32.totalorder %s93, 0
      %s96 = sadd.s32 %s95, 1
      %s97 = scalar_select %p94, %s95, %s96
      %p100 = pneg %p94
      %p101 = scmp.eq.s32.totalorder %s21, 3
      %p102 = por %p100, %p101
      %p103 = scmp.ne.s32.totalorder %s95, %s98
      %p104 = scmp.eq.s32.totalorder %s21, 0
      %p105 = por %p103, %p104
      %p106 = scmp.ne.s32.totalorder %s95, %s98
      %p107 = scmp.eq.s32.totalorder %s26, 3
      %p108 = por %p106, %p107
      %p109 = scmp.ne.s32.totalorder %s98, %s99
      %p110 = scmp.eq.s32.totalorder %s26, 0
      %p111 = por %p109, %p110
      %p112 = scmp.ne.s32.totalorder %s98, %s99
      %p113 = scmp.eq.s32.totalorder %s27, 3
      %p114 = por %p112, %p113
      %p116 = scmp.ne.s32.totalorder %s99, %s115
      %p117 = scmp.eq.s32.totalorder %s27, 0
      %p118 = por %p116, %p117
      %s119 = ssub.s32 %s29, %s36
      %s120 = ssub.s32 %s28, %s40
      %s121 = sor.u32 %s119, %s120
      %p122 = scmp.eq.s32.totalorder %s121, 0
      %s124 = sadd.s32 %s123, 1
      %s125 = scalar_select %p122, %s123, %s124
      %p128 = pneg %p122
      %p129 = scmp.eq.s32.totalorder %s21, 3
      %p130 = por %p128, %p129
      %p131 = scmp.ne.s32.totalorder %s123, %s126
      %p132 = scmp.eq.s32.totalorder %s21, 0
      %p133 = por %p131, %p132
      %p134 = scmp.ne.s32.totalorder %s123, %s126
      %p135 = scmp.eq.s32.totalorder %s26, 3
      %p136 = por %p134, %p135
      %p137 = scmp.ne.s32.totalorder %s126, %s127
      %p138 = scmp.eq.s32.totalorder %s26, 0
      %p139 = por %p137, %p138
      %p140 = scmp.ne.s32.totalorder %s126, %s127
      %p141 = scmp.eq.s32.totalorder %s27, 3
      %p142 = por %p140, %p141
      %p144 = scmp.ne.s32.totalorder %s127, %s143
      %p145 = scmp.eq.s32.totalorder %s27, 0
      %p146 = por %p144, %p145
      %s147 = ssub.s32 %s29, %s36
      %s148 = ssub.s32 %s28, %s40
      %s149 = sor.u32 %s147, %s148
      %p150 = scmp.eq.s32.totalorder %s149, 0
      %s152 = sadd.s32 %s151, 1
      %s153 = scalar_select %p150, %s151, %s152
      %p156 = pneg %p150
      %p157 = scmp.eq.s32.totalorder %s21, 3
      %p158 = por %p156, %p157
      %p159 = scmp.ne.s32.totalorder %s151, %s154
      %p160 = scmp.eq.s32.totalorder %s21, 0
      %p161 = por %p159, %p160
      %p162 = scmp.ne.s32.totalorder %s151, %s154
      %p163 = scmp.eq.s32.totalorder %s26, 3
      %p164 = por %p162, %p163
      %p165 = scmp.ne.s32.totalorder %s154, %s155
      %p166 = scmp.eq.s32.totalorder %s26, 0
      %p167 = por %p165, %p166
      %p168 = scmp.ne.s32.totalorder %s154, %s155
      %p169 = scmp.eq.s32.totalorder %s27, 3
      %p170 = por %p168, %p169
      %p172 = scmp.ne.s32.totalorder %s155, %s171
      %p173 = scmp.eq.s32.totalorder %s27, 0
      %p174 = por %p172, %p173
      %s175 = ssub.s32 %s29, %s36
      %s176 = ssub.s32 %s28, %s40
      %s177 = sor.u32 %s175, %s176
      %p178 = scmp.eq.s32.totalorder %s177, 0
      %s180 = sadd.s32 %s179, 1
      %s181 = scalar_select %p178, %s179, %s180
      %p184 = pneg %p178
      %p185 = scmp.eq.s32.totalorder %s21, 3
      %p186 = por %p184, %p185
      %p187 = scmp.ne.s32.totalorder %s179, %s182
      %p188 = scmp.eq.s32.totalorder %s21, 0
      %p189 = por %p187, %p188
      %p190 = scmp.ne.s32.totalorder %s179, %s182
      %p191 = scmp.eq.s32.totalorder %s26, 3
      %p192 = por %p190, %p191
      %p193 = scmp.ne.s32.totalorder %s182, %s183
      %p194 = scmp.eq.s32.totalorder %s26, 0
      %p195 = por %p193, %p194
      %p196 = scmp.ne.s32.totalorder %s182, %s183
      %p197 = scmp.eq.s32.totalorder %s27, 3
      %p198 = por %p196, %p197
      %p200 = scmp.ne.s32.totalorder %s183, %s199
      %p201 = scmp.eq.s32.totalorder %s27, 0
      %p202 = por %p200, %p201
      %s203 = ssub.s32 %s29, %s36
      %s204 = ssub.s32 %s28, %s40
      %s205 = sor.u32 %s203, %s204
      %p206 = scmp.eq.s32.totalorder %s205, 0
      %s208 = sadd.s32 %s207, 1
      %s209 = scalar_select %p206, %s207, %s208
      %p212 = pneg %p206
      %p213 = scmp.eq.s32.totalorder %s21, 3
      %p214 = por %p212, %p213
      %p215 = scmp.ne.s32.totalorder %s207, %s210
      %p216 = scmp.eq.s32.totalorder %s21, 0
      %p217 = por %p215, %p216
      %p218 = scmp.ne.s32.totalorder %s207, %s210
      %p219 = scmp.eq.s32.totalorder %s26, 3
      %p220 = por %p218, %p219
      %p221 = scmp.ne.s32.totalorder %s210, %s211
      %p222 = scmp.eq.s32.totalorder %s26, 0
      %p223 = por %p221, %p222
      %p224 = scmp.ne.s32.totalorder %s210, %s211
      %p225 = scmp.eq.s32.totalorder %s27, 3
      %p226 = por %p224, %p225
      %p228 = scmp.ne.s32.totalorder %s211, %s227
      %p229 = scmp.eq.s32.totalorder %s27, 0
      %p230 = por %p228, %p229
      %p231 = scmp.le.s32.totalorder 1, %s21
      %p232 = scmp.lt.s32.totalorder %s21, 5
      %p233 = pnand %p231, %p232
      %p234 = pneg %p233
      // Predicated region
      $region9: #{tpu_custom_call.1} parent=5 // pred_check
        _
      $region10: #{tpu_custom_call.1} parent=5 // pred_check_branch
        %236 = sbr.rel (%p233) target = $region12
      $region11: #{tpu_custom_call.1} parent=5 // pred_region
        %s237 = ssub.s32 %s21, 1
        // Predicated region
        $region13: #{tpu_custom_call.1} parent=11 // pred_check
          %p238 = pneg %p59
        $region14: #{tpu_custom_call.1} parent=11 // pred_check_branch
          %240 = sbr.rel (%p238) target = $region16
        $region15: #{tpu_custom_call.1} parent=11 // pred_region
          %s242 = ssub.s32 32, 32
          %243 = vsyncadd [#allocation3], %s242
          %s244 = smul.addr %s30, 32
          %s245 = scalar_lea.hbm %s0, %s244
          %s247 = sshll.u32 [#allocation2], 4
          %s248 = int_to_ptr.vmem [resolvable:$true] %s247
          %250 = dma.hbm_to_vmem [thread:$0]  %s245, 32, %s248, [#allocation3]
        $region16: #{tpu_custom_call.1} parent=11 // pred_fallthru
          _
        // Predicated region
        $region17: #{tpu_custom_call.1} parent=11 // pred_check
          %p251 = pneg %p85
        $region18: #{tpu_custom_call.1} parent=11 // pred_check_branch
          %253 = sbr.rel (%p251) target = $region20
        $region19: #{tpu_custom_call.1} parent=11 // pred_region
          %p254 = scmp.lt.s32.totalorder %s30, 0
          %s255 = scalar_select %p254, %s30, 0
          %s256 = smul.addr %s255, 2
          %s257 = scalar_lea.vmem %s1, %s256
        $region20: #{tpu_custom_call.1} parent=11 // pred_fallthru
          _
        // Predicated region
        $region21: #{tpu_custom_call.1} parent=11 // pred_check
          %p258 = pneg %p111
        $region22: #{tpu_custom_call.1} parent=11 // pred_check_branch
          %260 = sbr.rel (%p258) target = $region24
        $region23: #{tpu_custom_call.1} parent=11 // pred_region
          %s262 = ssub.s32 32, 32
          %263 = vsyncadd [#allocation6], %s262
          %s264 = smul.addr %s30, 32
          %s265 = scalar_lea.hbm %s2, %s264
          %s267 = sshll.u32 [#allocation5], 4
          %s268 = int_to_ptr.vmem [resolvable:$true] %s267
          %270 = dma.hbm_to_vmem [thread:$0]  %s265, 32, %s268, [#allocation6]
        $region24: #{tpu_custom_call.1} parent=11 // pred_fallthru
          _
      $region12: #{tpu_custom_call.1} parent=5 // pred_fallthru
        _
      %p271 = scmp.lt.s32.totalorder %s21, 4
      // Predicated region
      $region25: #{tpu_custom_call.1} parent=5 // pred_check
        %p272 = pneg %p271
      $region26: #{tpu_custom_call.1} parent=5 // pred_check_branch
        %274 = sbr.rel (%p272) target = $region28
      $region27: #{tpu_custom_call.1} parent=5 // pred_region
        // Predicated region
        $region29: #{tpu_custom_call.1} parent=27 // pred_check
          %p275 = pneg %p133
        $region30: #{tpu_custom_call.1} parent=27 // pred_check_branch
          %277 = sbr.rel (%p275) target = $region32
        $region31: #{tpu_custom_call.1} parent=27 // pred_region
          %p278 = scmp.lt.s32.totalorder %s29, 3
          %s279 = scalar_select %p278, %s29, 3
          %p280 = scmp.lt.s32.totalorder %s28, 0
          %s281 = scalar_select %p280, %s28, 0
          %s282 = sadd.s32 %s281, %s279
          %s283 = smul.addr %s282, 2
          %s284 = scalar_lea.vmem %s3, %s283
        $region32: #{tpu_custom_call.1} parent=27 // pred_fallthru
          _
        // Predicated region
        $region33: #{tpu_custom_call.1} parent=27 // pred_check
          %p285 = pneg %p161
        $region34: #{tpu_custom_call.1} parent=27 // pred_check_branch
          %287 = sbr.rel (%p285) target = $region36
        $region35: #{tpu_custom_call.1} parent=27 // pred_region
          %s288 = sand.u32 %s21, 1
          %s289 = scalar_lea.sflag [#allocation3], %s288
          %s290 = sand.u32 %s151, 1
          %s291 = smul.addr %s290, 2
          %s292 = scalar_lea.vmem [#allocation7], %s291
          %s294 = ssub.s32 32, 32
          %295 = vsyncadd %s289, %s294
          %s296 = sadd.s32 %s28, %s29
          %s297 = smul.addr %s296, 32
          %s298 = scalar_lea.hbm %s4, %s297
          %s300 = sshll.u32 %s292, 4
          %s301 = int_to_ptr.vmem [resolvable:$true] %s300
          %303 = dma.hbm_to_vmem [thread:$0]  %s298, 32, %s301, %s289
        $region36: #{tpu_custom_call.1} parent=27 // pred_fallthru
          _
      $region28: #{tpu_custom_call.1} parent=5 // pred_fallthru
        _
      %p304 = scmp.le.s32.totalorder 1, %s21
      %p305 = scmp.lt.s32.totalorder %s21, 5
      %p306 = pnand %p304, %p305
      %p307 = pneg %p306
      // Predicated region
      $region37: #{tpu_custom_call.1} parent=5 // pred_check
        _
      $region38: #{tpu_custom_call.1} parent=5 // pred_check_branch
        %309 = sbr.rel (%p306) target = $region40
      $region39: #{tpu_custom_call.1} parent=5 // pred_region
        %s310 = ssub.s32 %s21, 1
        // Predicated region
        $region41: #{tpu_custom_call.1} parent=39 // pred_check
          %p311 = pneg %p59
        $region42: #{tpu_custom_call.1} parent=39 // pred_check_branch
          %313 = sbr.rel (%p311) target = $region44
        $region43: #{tpu_custom_call.1} parent=39 // pred_region
          %314 = dma.done [#allocation3], 32
        $region44: #{tpu_custom_call.1} parent=39 // pred_fallthru
          _
        // Predicated region
        $region45: #{tpu_custom_call.1} parent=39 // pred_check
          %p315 = pneg %p111
        $region46: #{tpu_custom_call.1} parent=39 // pred_check_branch
          %317 = sbr.rel (%p315) target = $region48
        $region47: #{tpu_custom_call.1} parent=39 // pred_region
          %318 = dma.done [#allocation6], 32
        $region48: #{tpu_custom_call.1} parent=39 // pred_fallthru
          _
        %s319 = sand.u32 %s26, 1
        %s320 = scalar_lea.sflag [#allocation3], %s319
        %s321 = sand.u32 %s154, 1
        %s322 = smul.addr %s321, 2
        %s323 = scalar_lea.vmem [#allocation7], %s322
        // Predicated region
        $region49: #{tpu_custom_call.1} parent=39 // pred_check
          %p324 = pneg %p167
        $region50: #{tpu_custom_call.1} parent=39 // pred_check_branch
          %326 = sbr.rel (%p324) target = $region52
        $region51: #{tpu_custom_call.1} parent=39 // pred_region
          %327 = dma.done %s320, 32
        $region52: #{tpu_custom_call.1} parent=39 // pred_fallthru
          _
        %p328 = pneg %p59
        %p329 = pneg %p56
        %p330 = scmp.lt.s32.totalorder %s30, 0
        %s331 = scalar_select %p330, %s30, 0
        %s332 = smul.addr %s331, 2
        %s333 = scalar_lea.vmem %s1, %s332
        %p334 = pneg %p85
        %p335 = pneg %p82
        %p336 = pneg %p111
        %p337 = pneg %p108
        %p338 = scmp.lt.s32.totalorder %s31, 3
        %s339 = scalar_select %p338, %s31, 3
        %p340 = scmp.lt.s32.totalorder %s30, 0
        %s341 = scalar_select %p340, %s30, 0
        %s342 = sadd.s32 %s341, %s339
        %s343 = smul.addr %s342, 2
        %s344 = scalar_lea.vmem %s3, %s343
        %p345 = pneg %p139
        %p346 = pneg %p136
        %s347 = sand.u32 %s26, 1
        %s348 = scalar_lea.sflag [#allocation3], %s347
        %s349 = sand.u32 %s154, 1
        %s350 = smul.addr %s349, 2
        %s351 = scalar_lea.vmem [#allocation7], %s350
        %p352 = pneg %p167
        %p353 = pneg %p164
        %p354 = pneg %p195
        %p355 = pneg %p192
        %s356 = sand.u32 %s182, 1
        %s357 = scalar_lea.sflag [#allocation4], %s356
        %s358 = sand.u32 %s182, 1
        %s359 = smul.addr %s358, 2
        %s360 = scalar_lea.vmem [#allocation8], %s359
        %p361 = pneg %p223
        %p362 = pneg %p220
        %s363 = sand.u32 %s210, 1
        %s364 = scalar_lea.sflag [#allocation10], %s363
        %s365 = sand.u32 %s210, 1
        %s366 = smul.addr %s365, 2
        %s367 = scalar_lea.vmem [#allocation9], %s366
        %p368 = scmp.lt.s32.totalorder %s30, 0
        %s369 = scalar_select %p368, %s30, 0
        %s370 = smul.addr %s369, 2
        %s371 = scalar_lea.vmem %s1, %s370
        %p372 = scmp.lt.s32.totalorder %s31, 3
        %s373 = scalar_select %p372, %s31, 3
        %p374 = scmp.lt.s32.totalorder %s30, 0
        %s375 = scalar_select %p374, %s30, 0
        %s376 = sadd.s32 %s375, %s373
        %s377 = smul.addr %s376, 2
        %s378 = scalar_lea.vmem %s3, %s377
        %v379 = vld [vmem:[#allocation2] sm:$0x3]
        %v380 = vld [vmem:[%s371] sm:$0x3]
        %v381 = vld [vmem:[#allocation5] sm:$0x3]
        %v382 = vld [vmem:[%s378] sm:$0x3]
        %v383 = vmul.f32 %v382, %v379
        %384 = vrot.lane.b32.xlu0 %v382, 112
        %v385 = vpop.permute.xlu0 %384
        %v386 = vmul.f32 %v385, %v380
        %v387 = vadd.f32 %v383, %v386
        %388 = vrot.lane.b32.xlu0 %v382, 16
        %v389 = vpop.permute.xlu0 %388
        %v390 = vmul.f32 %v389, %v381
        %v391 = vadd.f32 %v387, %v390
        %392 = vst [vmem:[%s360] sm:$0x3] %v391
        %v393 = vld [vmem:[%s323] sm:$0x3]
        %v394 = vmul.f32 %v393, %v379
        %395 = vrot.lane.b32.xlu0 %v393, 112
        %v396 = vpop.permute.xlu0 %395
        %v397 = vmul.f32 %v396, %v380
        %v398 = vadd.f32 %v394, %v397
        %399 = vrot.lane.b32.xlu0 %v393, 16
        %v400 = vpop.permute.xlu0 %399
        %v401 = vmul.f32 %v400, %v381
        %v402 = vadd.f32 %v398, %v401
        %403 = vst [vmem:[%s367] sm:$0x3] %v402
        %s404 = sand.u32 %s182, 1
        %s405 = scalar_lea.sflag [#allocation4], %s404
        %s406 = sand.u32 %s182, 1
        %s407 = smul.addr %s406, 2
        %s408 = scalar_lea.vmem [#allocation8], %s407
        %s409 = sand.u32 %s210, 1
        %s410 = scalar_lea.sflag [#allocation10], %s409
        %s411 = sand.u32 %s210, 1
        %s412 = smul.addr %s411, 2
        %s413 = scalar_lea.vmem [#allocation9], %s412
        // Predicated region
        $region53: #{tpu_custom_call.1} parent=39 // pred_check
          %p414 = pneg %p192
        $region54: #{tpu_custom_call.1} parent=39 // pred_check_branch
          %416 = sbr.rel (%p414) target = $region56
        $region55: #{tpu_custom_call.1} parent=39 // pred_region
          %s418 = ssub.s32 32, 32
          %419 = vsyncadd %s405, %s418
          %s420 = sadd.s32 %s30, %s31
          %s421 = smul.addr %s420, 32
          %s422 = scalar_lea.hbm %s5, %s421
          %s424 = sshll.u32 %s408, 4
          %s425 = int_to_ptr.vmem [resolvable:$true] %s424
          %427 = dma.vmem_to_hbm [thread:$0]  %s425, 32, %s422, %s405
        $region56: #{tpu_custom_call.1} parent=39 // pred_fallthru
          _
        // Predicated region
        $region57: #{tpu_custom_call.1} parent=39 // pred_check
          %p428 = pneg %p220
        $region58: #{tpu_custom_call.1} parent=39 // pred_check_branch
          %430 = sbr.rel (%p428) target = $region60
        $region59: #{tpu_custom_call.1} parent=39 // pred_region
          %s432 = ssub.s32 32, 32
          %433 = vsyncadd %s410, %s432
          %s434 = sadd.s32 %s30, %s31
          %s435 = smul.addr %s434, 32
          %s436 = scalar_lea.hbm %s6, %s435
          %s438 = sshll.u32 %s413, 4
          %s439 = int_to_ptr.vmem [resolvable:$true] %s438
          %441 = dma.vmem_to_hbm [thread:$0]  %s439, 32, %s436, %s410
        $region60: #{tpu_custom_call.1} parent=39 // pred_fallthru
          _
      $region40: #{tpu_custom_call.1} parent=5 // pred_fallthru
        _
      %p442 = scmp.le.s32.totalorder 2, %s21
      // Predicated region
      $region61: #{tpu_custom_call.1} parent=5 // pred_check
        %p443 = pneg %p442
      $region62: #{tpu_custom_call.1} parent=5 // pred_check_branch
        %445 = sbr.rel (%p443) target = $region64
      $region63: #{tpu_custom_call.1} parent=5 // pred_region
        %s446 = ssub.s32 %s21, 2
        // Predicated region
        $region65: #{tpu_custom_call.1} parent=63 // pred_check
          %p447 = pneg %p198
        $region66: #{tpu_custom_call.1} parent=63 // pred_check_branch
          %449 = sbr.rel (%p447) target = $region68
        $region67: #{tpu_custom_call.1} parent=63 // pred_region
          %s450 = sand.u32 %s183, 1
          %s451 = scalar_lea.sflag [#allocation4], %s450
          %s452 = sand.u32 %s183, 1
          %s453 = smul.addr %s452, 2
          %s454 = scalar_lea.vmem [#allocation8], %s453
          %455 = dma.done %s451, 32
        $region68: #{tpu_custom_call.1} parent=63 // pred_fallthru
          _
        // Predicated region
        $region69: #{tpu_custom_call.1} parent=63 // pred_check
          %p456 = pneg %p226
        $region70: #{tpu_custom_call.1} parent=63 // pred_check_branch
          %458 = sbr.rel (%p456) target = $region72
        $region71: #{tpu_custom_call.1} parent=63 // pred_region
          %s459 = sand.u32 %s211, 1
          %s460 = scalar_lea.sflag [#allocation10], %s459
          %s461 = sand.u32 %s211, 1
          %s462 = smul.addr %s461, 2
          %s463 = scalar_lea.vmem [#allocation9], %s462
          %464 = dma.done %s460, 32
        $region72: #{tpu_custom_call.1} parent=63 // pred_fallthru
          _
      $region64: #{tpu_custom_call.1} parent=5 // pred_fallthru
        _
    $region6: #{tpu_custom_call.1} parent=1 // loop_footer
      %s25 = sadd.s32 1, %s21
    $region7: #{tpu_custom_call.1} parent=1 // loop_footer_branch
      %20 = sbr.rel target = $region3
    $region8: #{tpu_custom_call.1} parent=1 // loop_exit
      _
    %465 = vsyncpa [#allocation3], 1
    %s466 = scalar_lea.sflag [#allocation3], 1
    %467 = vsyncpa %s466, 1
    %468 = vsyncpa [#allocation6], 1
    %469 = vsyncpa [#allocation4], 1
    %s470 = scalar_lea.sflag [#allocation4], 1
    %471 = vsyncpa %s470, 1
    %472 = vsyncpa [#allocation10], 1
    %s473 = scalar_lea.sflag [#allocation10], 1
    %474 = vsyncpa %s473, 1

</llo_original>
